<compile_context>
chip_gen: v5e
topology: v5e:2x2
jax: 0.10.0
libtpu: 0.0.40
codegen_flags: <defaults>
</compile_context>

<pallas_src>
import functools

import jax
import jax.numpy as jnp
from jax.experimental import pallas as pl
from jax.experimental.pallas import tpu as pltpu


def autopad(k, p=None, d=1):
    """Pad to 'same' shape outputs (mirrors the PyTorch helper)."""
    if d > 1:
        k = d * (k - 1) + 1 if isinstance(k, int) else [d * (x - 1) + 1 for x in k]
    if p is None:
        p = k // 2 if isinstance(k, int) else [x // 2 for x in k]
    return p


def _round_up(x, m):
    return (x + m - 1) // m * m


@functools.partial(jax.jit, static_argnames=("k", "pad"))
def conv_bn_silu(x_nchw, w_oihw, bn_gamma, bn_beta, bn_mean, bn_var,
                 *, k=3, pad=1, eps=1e-5):
    """Forward pass of `Conv` (stride=1, groups=1, dilation=1, odd k)."""
    N, Cin, H, W = x_nchw.shape
    Cout = w_oihw.shape[0]
    # TODO(synk): stride/dilation/groups != 1 not supported (module defaults only).
    if 2 * pad != k - 1:
        raise ValueError("kernel assumes 'same' output size (2*pad == k-1, odd k)")

    Cin_p = _round_up(Cin, 16)          # align tap blocks to the bf16 sublane tile
    Wp = W + 2 * pad                    # padded width (overcompute columns per row)
    # extra bottom rows so every flat tap window [off, off + H*Wp) stays in bounds
    need = (k - 1) * (Wp + 1) - 2 * pad * Wp
    extra = max(0, -(-need // Wp))
    Hp = H + 2 * pad + extra
    Lp = Hp * Wp                        # flat padded-image length
    L_out = H * Wp                      # flat output length (Wp cols/row, last Wp-W garbage)
    KCIN = k * k * Cin_p                # im2col contraction size

    # ---- fold BatchNorm: scale goes into the weights, shift stays in the kernel
    scale = bn_gamma / jnp.sqrt(bn_var + eps)                          # (Cout,)
    shift = (bn_beta - bn_mean * scale).reshape(Cout, 1).astype(jnp.float32)
    w = w_oihw.astype(jnp.float32) * scale[:, None, None, None]        # (Cout,Cin,k,k)
    w = jnp.pad(w, ((0, 0), (0, Cin_p - Cin), (0, 0), (0, 0)))
    # (Cout,Cin_p,k,k) -> (Cout,k,k,Cin_p) -> (Cout, k*k*Cin_p): tap-major, cin-minor
    w2 = jnp.transpose(w, (0, 2, 3, 1)).reshape(Cout, KCIN).astype(jnp.bfloat16)

    # ---- pad + flatten the input, staying in NCHW (no transposes), cast to bf16
    x = x_nchw.astype(jnp.bfloat16)
    x = jnp.pad(x, ((0, 0), (0, Cin_p - Cin), (pad, pad + extra), (pad, pad)))
    x = x.reshape(N, Cin_p, Lp)

    def kernel(x_ref, w_ref, shift_ref, o_ref):
        # x_ref    : (1, Cin_p, Lp)     bf16  flat padded image
        # w_ref    : (Cout, KCIN)       bf16  BN-scale-folded weights
        # shift_ref: (Cout, 1)          f32   folded BN shift
        # o_ref    : (1, Cout, L_out)   f32   flat (H, Wp) output, NCHW channel-major
        taps = []
        for kh in range(k):
            for kw in range(k):
                off = kh * Wp + kw                              # static offsets
                taps.append(x_ref[0, :, off:off + L_out])       # (Cin_p, L_out)
        patches = jnp.concatenate(taps, axis=0)                 # (KCIN, L_out) bf16
        acc = jnp.dot(w_ref[...], patches,
                      preferred_element_type=jnp.float32)       # (Cout, L_out) f32
        y = acc + shift_ref[...]                                # BN shift
        y = y * jax.nn.sigmoid(y)                               # SiLU, f32 epilogue
        o_ref[0] = y.astype(o_ref.dtype)

    flops = 2 * N * H * Wp * k * k * Cin * Cout
    bytes_accessed = x.size * 2 + w2.size * 2 + N * Cout * L_out * 4
    cost = pl.CostEstimate(flops=flops,
                           transcendentals=N * Cout * H * Wp,
                           bytes_accessed=bytes_accessed)

    # TODO(synk): add halo'd H-tiling as a second ("parallel") grid axis for
    # images whose padded plane no longer fits VMEM (relevant on v7x, 64 MiB).
    out_flat = pl.pallas_call(
        kernel,
        out_shape=jax.ShapeDtypeStruct((N, Cout, L_out), jnp.float32),
        grid_spec=pltpu.PrefetchScalarGridSpec(
            num_scalar_prefetch=0,
            grid=(N,),
            in_specs=[
                pl.BlockSpec((1, Cin_p, Lp), lambda n: (n, 0, 0)),
                pl.BlockSpec((Cout, KCIN), lambda n: (0, 0)),
                pl.BlockSpec((Cout, 1), lambda n: (0, 0)),
            ],
            out_specs=pl.BlockSpec((1, Cout, L_out), lambda n: (n, 0, 0)),
        ),
        compiler_params=pltpu.CompilerParams(
            dimension_semantics=("parallel",)),
        cost_estimate=cost,
    )(x, w2, shift)

    # Drop the Wp-W overcompute columns; the result is already NCHW.
    return out_flat.reshape(N, Cout, H, Wp)[:, :, :, :W]


def reference_conv_bn_silu(x, w, gamma, beta, mean, var,
                           *, pad=1, eps=1e-5, cast_bf16=True):
    """Pure-JAX reference. cast_bf16=True mirrors the kernel's bf16 matmul inputs."""
    scale = gamma / jnp.sqrt(var + eps)
    shift = beta - mean * scale
    wf = w * scale[:, None, None, None]
    if cast_bf16:
        xq = x.astype(jnp.bfloat16).astype(jnp.float32)
        wq = wf.astype(jnp.bfloat16).astype(jnp.float32)
    else:
        xq, wq = x, wf
    y = jax.lax.conv_general_dilated(
        xq, wq, window_strides=(1, 1),
        padding=((pad, pad), (pad, pad)),
        dimension_numbers=("NCHW", "OIHW", "NCHW"),
        precision=jax.lax.Precision.HIGHEST)
    y = y + shift.reshape(1, -1, 1, 1)
    return y * jax.nn.sigmoid(y)


if __name__ == "__main__":
    # Conv(c1=4, c2=8, k=3, s=1, p=autopad(3)=1, g=1, d=1, act=True)
    N, C1, C2, H, W, K = 2, 4, 8, 16, 16, 3
    P = autopad(K)

    key = jax.random.PRNGKey(0)
    kx, kw, kg, kb, km, kv = jax.random.split(key, 6)

    x = jax.random.normal(kx, (N, C1, H, W), dtype=jnp.float32)
    w = 0.1 * jax.random.normal(kw, (C2, C1, K, K), dtype=jnp.float32)
    gamma = 1.0 + 0.1 * jax.random.normal(kg, (C2,), dtype=jnp.float32)
    beta = 0.1 * jax.random.normal(kb, (C2,), dtype=jnp.float32)
    run_mean = 0.05 * jax.random.normal(km, (C2,), dtype=jnp.float32)
    run_var = 1.0 + 0.1 * jax.random.uniform(kv, (C2,), dtype=jnp.float32)

    out = conv_bn_silu(x, w, gamma, beta, run_mean, run_var, k=K, pad=P)
    out = jax.block_until_ready(out)
    assert out.shape == (N, C2, H, W)

    # Tight check against a reference that uses the same bf16-rounded operands.
    ref_bf16 = reference_conv_bn_silu(x, w, gamma, beta, run_mean, run_var,
                                      pad=P, cast_bf16=True)
    assert jnp.allclose(out, ref_bf16, atol=2e-3, rtol=2e-3), "mismatch vs bf16 reference"

    # Loose sanity check against the full-f32 PyTorch-semantics reference.
    ref_f32 = reference_conv_bn_silu(x, w, gamma, beta, run_mean, run_var,
                                     pad=P, cast_bf16=False)
    assert jnp.allclose(out, ref_f32, atol=5e-2, rtol=5e-2), "mismatch vs f32 reference"

    print("KERNEL_OK")
</pallas_src>

<mosaic_0001>
module attributes {stable_mosaic.version = 11 : i64} {
  func.func @kernel(%arg0: i32, %arg1: memref<1x16x342xbf16, #tpu.memory_space<vmem>>, %arg2: memref<8x144xbf16, #tpu.memory_space<vmem>>, %arg3: memref<8x1xf32, #tpu.memory_space<vmem>>, %arg4: memref<1x8x288xf32, #tpu.memory_space<vmem>>) attributes {dimension_semantics = [#tpu.dimension_semantics<parallel>], iteration_bounds = array<i64: 2>, scalar_prefetch = 0 : i64, scratch_operands = 0 : i64, tpu.core_type = #tpu.core_type<tc>, window_params = [{transform_indices = @transform_0, window_bounds = array<i64: 1, 16, 342>}, {pipeline_mode = #tpu.pipeline_mode<synchronous>, transform_indices = @transform_1, window_bounds = array<i64: 8, 144>}, {pipeline_mode = #tpu.pipeline_mode<synchronous>, transform_indices = @transform_2, window_bounds = array<i64: 8, 1>}, {transform_indices = @transform_3, window_bounds = array<i64: 1, 8, 288>}]} {
    %c0 = arith.constant 0 : index
    %c0_0 = arith.constant 0 : index
    %c0_1 = arith.constant 0 : index
    %0 = vector.load %arg1[%c0, %c0_0, %c0_1] : memref<1x16x342xbf16, #tpu.memory_space<vmem>>, vector<1x16x288xbf16>
    %1 = vector.shape_cast %0 : vector<1x16x288xbf16> to vector<16x288xbf16>
    %c0_2 = arith.constant 0 : index
    %c0_3 = arith.constant 0 : index
    %c1 = arith.constant 1 : index
    %2 = vector.load %arg1[%c0_2, %c0_3, %c1] : memref<1x16x342xbf16, #tpu.memory_space<vmem>>, vector<1x16x288xbf16>
    %3 = vector.shape_cast %2 : vector<1x16x288xbf16> to vector<16x288xbf16>
    %c0_4 = arith.constant 0 : index
    %c0_5 = arith.constant 0 : index
    %c2 = arith.constant 2 : index
    %4 = vector.load %arg1[%c0_4, %c0_5, %c2] : memref<1x16x342xbf16, #tpu.memory_space<vmem>>, vector<1x16x288xbf16>
    %5 = vector.shape_cast %4 : vector<1x16x288xbf16> to vector<16x288xbf16>
    %c0_6 = arith.constant 0 : index
    %c0_7 = arith.constant 0 : index
    %c18 = arith.constant 18 : index
    %6 = vector.load %arg1[%c0_6, %c0_7, %c18] : memref<1x16x342xbf16, #tpu.memory_space<vmem>>, vector<1x16x288xbf16>
    %7 = vector.shape_cast %6 : vector<1x16x288xbf16> to vector<16x288xbf16>
    %c0_8 = arith.constant 0 : index
    %c0_9 = arith.constant 0 : index
    %c19 = arith.constant 19 : index
    %8 = vector.load %arg1[%c0_8, %c0_9, %c19] : memref<1x16x342xbf16, #tpu.memory_space<vmem>>, vector<1x16x288xbf16>
    %9 = vector.shape_cast %8 : vector<1x16x288xbf16> to vector<16x288xbf16>
    %c0_10 = arith.constant 0 : index
    %c0_11 = arith.constant 0 : index
    %c20 = arith.constant 20 : index
    %10 = vector.load %arg1[%c0_10, %c0_11, %c20] : memref<1x16x342xbf16, #tpu.memory_space<vmem>>, vector<1x16x288xbf16>
    %11 = vector.shape_cast %10 : vector<1x16x288xbf16> to vector<16x288xbf16>
    %c0_12 = arith.constant 0 : index
    %c0_13 = arith.constant 0 : index
    %c36 = arith.constant 36 : index
    %12 = vector.load %arg1[%c0_12, %c0_13, %c36] : memref<1x16x342xbf16, #tpu.memory_space<vmem>>, vector<1x16x288xbf16>
    %13 = vector.shape_cast %12 : vector<1x16x288xbf16> to vector<16x288xbf16>
    %c0_14 = arith.constant 0 : index
    %c0_15 = arith.constant 0 : index
    %c37 = arith.constant 37 : index
    %14 = vector.load %arg1[%c0_14, %c0_15, %c37] : memref<1x16x342xbf16, #tpu.memory_space<vmem>>, vector<1x16x288xbf16>
    %15 = vector.shape_cast %14 : vector<1x16x288xbf16> to vector<16x288xbf16>
    %c0_16 = arith.constant 0 : index
    %c0_17 = arith.constant 0 : index
    %c38 = arith.constant 38 : index
    %16 = vector.load %arg1[%c0_16, %c0_17, %c38] : memref<1x16x342xbf16, #tpu.memory_space<vmem>>, vector<1x16x288xbf16>
    %17 = vector.shape_cast %16 : vector<1x16x288xbf16> to vector<16x288xbf16>
    %18 = tpu.concatenate %1, %3, %5, %7, %9, %11, %13, %15, %17 in 0 : vector<16x288xbf16>, vector<16x288xbf16>, vector<16x288xbf16>, vector<16x288xbf16>, vector<16x288xbf16>, vector<16x288xbf16>, vector<16x288xbf16>, vector<16x288xbf16>, vector<16x288xbf16> -> vector<144x288xbf16>
    %c0_18 = arith.constant 0 : index
    %c0_19 = arith.constant 0 : index
    %19 = vector.load %arg2[%c0_18, %c0_19] : memref<8x144xbf16, #tpu.memory_space<vmem>>, vector<8x144xbf16>
    %cst = arith.constant dense<0.000000e+00> : vector<8x288xf32>
    %20 = tpu.matmul %19, %18, %cst {dimension_numbers = #tpu.dot_dimension_numbers<[1], [0], [0], [1], [0, 0, 1, 1], [], []>} : vector<8x144xbf16>, vector<144x288xbf16>, vector<8x288xf32> -> vector<8x288xf32>
    %c0_20 = arith.constant 0 : index
    %c0_21 = arith.constant 0 : index
    %21 = vector.load %arg3[%c0_20, %c0_21] : memref<8x1xf32, #tpu.memory_space<vmem>>, vector<8x1xf32>
    %22 = vector.broadcast %21 : vector<8x1xf32> to vector<8x288xf32>
    %23 = arith.addf %20, %22 : vector<8x288xf32>
    %24 = arith.negf %23 : vector<8x288xf32>
    %25 = math.exp %24 : vector<8x288xf32>
    %cst_22 = arith.constant 1.000000e+00 : f32
    %26 = vector.broadcast %cst_22 : f32 to vector<8x288xf32>
    %27 = arith.addf %26, %25 : vector<8x288xf32>
    %28 = arith.divf %26, %27 : vector<8x288xf32>
    %29 = arith.mulf %23, %28 : vector<8x288xf32>
    %c0_23 = arith.constant 0 : index
    %c0_24 = arith.constant 0 : index
    %c0_25 = arith.constant 0 : index
    %30 = vector.load %arg4[%c0_23, %c0_24, %c0_25] : memref<1x8x288xf32, #tpu.memory_space<vmem>>, vector<1x8x288xf32>
    %31 = vector.shape_cast %30 : vector<1x8x288xf32> to vector<8x288xf32>
    %32 = vector.shape_cast %29 : vector<8x288xf32> to vector<1x8x288xf32>
    tpu.vector_store %arg4[%c0_23, %c0_24, %c0_25], %32 {strides = array<i32>} : memref<1x8x288xf32, #tpu.memory_space<vmem>>, vector<1x8x288xf32>,
    return
  }
  func.func @transform_0(%arg0: i32) -> (i32, i32, i32) {
    %c0_i32 = arith.constant 0 : i32
    %c0_i32_0 = arith.constant 0 : i32
    %c0_i32_1 = arith.constant 0 : i32
    return %arg0, %c0_i32, %c0_i32_0 : i32, i32, i32
  }
  func.func @transform_1(%arg0: i32) -> (i32, i32) {
    %c0_i32 = arith.constant 0 : i32
    %c0_i32_0 = arith.constant 0 : i32
    %c0_i32_1 = arith.constant 0 : i32
    return %c0_i32, %c0_i32_0 : i32, i32
  }
  func.func @transform_2(%arg0: i32) -> (i32, i32) {
    %c0_i32 = arith.constant 0 : i32
    %c0_i32_0 = arith.constant 0 : i32
    %c0_i32_1 = arith.constant 0 : i32
    return %c0_i32, %c0_i32_0 : i32, i32
  }
  func.func @transform_3(%arg0: i32) -> (i32, i32, i32) {
    %c0_i32 = arith.constant 0 : i32
    %c0_i32_0 = arith.constant 0 : i32
    %c0_i32_1 = arith.constant 0 : i32
    return %arg0, %c0_i32, %c0_i32_0 : i32, i32, i32
  }
}

</mosaic_0001>

<llo_original>
// kernel: conv_bn_silu.1
$region0: #{conv_bn_silu.1}
  #allocation0 [shape = 'u32[]', space=smem, size = 0x4, offset = 0x4, fixed_abs, tag = 'smem constant byte address 0x4 - core index']
  #allocation1 [shape = 'u32[72,128]{1,0:T(1,128)}', space=vmem, size = 0x9000, scoped, tag = 'internal scratch']
  %s0 = inlined_call_operand.vmem [shape: bf16[2,16,342], index: 0, kind: input, shape index: {}]
  %s1 = inlined_call_operand.vmem [shape: bf16[8,144], index: 1, kind: input, shape index: {}]
  %s2 = inlined_call_operand.vmem [shape: f32[8,1], index: 2, kind: input, shape index: {}]
  %s3 = inlined_call_operand.vmem [shape: f32[2,8,288], index: 3, kind: output, shape index: {}]
  %s4 = sld [smem:[#allocation0]]
  $region45: #{conv_bn_silu.1} parent=0
    _
  %s6 = ssub.s32 1, %s4
  %s7 = scalar_select 0, %s6, %s4
  loop: start=0, step=1, limit=4
  $region2: #{conv_bn_silu.1} parent=0 // loop_pre_header
    _
  $region3: #{conv_bn_silu.1} parent=0 // loop_header
    %s9 = sphi 0, %s13
    %p10 = scmp.ge.s32.totalorder %s9, 4
    %s19 = sphi 0, %s21
    %s22 = sphi 0, %s19
    %s23 = sphi 0, %s22
    %s39 = sphi 0, %s23
    %s43 = sphi 0, %s43
    %s45 = sphi 0, %s43
    %s46 = sphi 0, %s45
    %s60 = sphi 0, %s46
    %s64 = sphi 0, %s64
    %s66 = sphi 0, %s64
    %s67 = sphi 0, %s66
    %s81 = sphi 0, %s67
    %s87 = sphi 0, %s89
    %s90 = sphi 0, %s87
    %s91 = sphi 0, %s90
    %s107 = sphi 0, %s91
  $region4: #{conv_bn_silu.1} parent=0 // loop_header_branch
    %12 = sbr.rel (%p10) target = $region8
  $region5: #{conv_bn_silu.1} parent=0 // loop_body
    %s14 = ssub.s32 %s9, 1
    %s15 = ssub.s32 %s9, 2
    %s16 = sadd.s32 %s9, 1
    %s17 = ssub.s32 %s9, %s16
    %p18 = scmp.eq.s32.totalorder %s17, 0
    %s20 = sadd.s32 %s19, 1
    %s21 = scalar_select %p18, %s19, %s20
    %p24 = pneg %p18
    %p25 = scmp.eq.s32.totalorder %s9, 1
    %p26 = por %p24, %p25
    %p27 = scmp.ne.s32.totalorder %s19, %s22
    %p28 = scmp.eq.s32.totalorder %s9, 0
    %p29 = por %p27, %p28
    %p30 = scmp.ne.s32.totalorder %s19, %s22
    %p31 = scmp.eq.s32.totalorder %s14, 1
    %p32 = por %p30, %p31
    %p33 = scmp.ne.s32.totalorder %s22, %s23
    %p34 = scmp.eq.s32.totalorder %s14, 0
    %p35 = por %p33, %p34
    %p36 = scmp.ne.s32.totalorder %s22, %s23
    %p37 = scmp.eq.s32.totalorder %s15, 1
    %p38 = por %p36, %p37
    %p40 = scmp.ne.s32.totalorder %s23, %s39
    %p41 = scmp.eq.s32.totalorder %s15, 0
    %p42 = por %p40, %p41
    %s44 = sadd.s32 %s43, 1
    %p47 = scmp.eq.s32.totalorder %s9, 1
    %p48 = scmp.ne.s32.totalorder %s43, %s45
    %p49 = scmp.eq.s32.totalorder %s9, 0
    %p50 = por %p48, %p49
    %p51 = scmp.ne.s32.totalorder %s43, %s45
    %p52 = scmp.eq.s32.totalorder %s14, 1
    %p53 = por %p51, %p52
    %p54 = scmp.ne.s32.totalorder %s45, %s46
    %p55 = scmp.eq.s32.totalorder %s14, 0
    %p56 = por %p54, %p55
    %p57 = scmp.ne.s32.totalorder %s45, %s46
    %p58 = scmp.eq.s32.totalorder %s15, 1
    %p59 = por %p57, %p58
    %p61 = scmp.ne.s32.totalorder %s46, %s60
    %p62 = scmp.eq.s32.totalorder %s15, 0
    %p63 = por %p61, %p62
    %s65 = sadd.s32 %s64, 1
    %p68 = scmp.eq.s32.totalorder %s9, 1
    %p69 = scmp.ne.s32.totalorder %s64, %s66
    %p70 = scmp.eq.s32.totalorder %s9, 0
    %p71 = por %p69, %p70
    %p72 = scmp.ne.s32.totalorder %s64, %s66
    %p73 = scmp.eq.s32.totalorder %s14, 1
    %p74 = por %p72, %p73
    %p75 = scmp.ne.s32.totalorder %s66, %s67
    %p76 = scmp.eq.s32.totalorder %s14, 0
    %p77 = por %p75, %p76
    %p78 = scmp.ne.s32.totalorder %s66, %s67
    %p79 = scmp.eq.s32.totalorder %s15, 1
    %p80 = por %p78, %p79
    %p82 = scmp.ne.s32.totalorder %s67, %s81
    %p83 = scmp.eq.s32.totalorder %s15, 0
    %p84 = por %p82, %p83
    %s85 = ssub.s32 %s9, %s16
    %p86 = scmp.eq.s32.totalorder %s85, 0
    %s88 = sadd.s32 %s87, 1
    %s89 = scalar_select %p86, %s87, %s88
    %p92 = pneg %p86
    %p93 = scmp.eq.s32.totalorder %s9, 1
    %p94 = por %p92, %p93
    %p95 = scmp.ne.s32.totalorder %s87, %s90
    %p96 = scmp.eq.s32.totalorder %s9, 0
    %p97 = por %p95, %p96
    %p98 = scmp.ne.s32.totalorder %s87, %s90
    %p99 = scmp.eq.s32.totalorder %s14, 1
    %p100 = por %p98, %p99
    %p101 = scmp.ne.s32.totalorder %s90, %s91
    %p102 = scmp.eq.s32.totalorder %s14, 0
    %p103 = por %p101, %p102
    %p104 = scmp.ne.s32.totalorder %s90, %s91
    %p105 = scmp.eq.s32.totalorder %s15, 1
    %p106 = por %p104, %p105
    %p108 = scmp.ne.s32.totalorder %s91, %s107
    %p109 = scmp.eq.s32.totalorder %s15, 0
    %p110 = por %p108, %p109
    %p111 = scmp.le.s32.totalorder 1, %s9
    %p112 = scmp.lt.s32.totalorder %s9, 3
    %p113 = pnand %p111, %p112
    %p114 = pneg %p113
    // Predicated region
    $region9: #{conv_bn_silu.1} parent=5 // pred_check
      _
    $region10: #{conv_bn_silu.1} parent=5 // pred_check_branch
      %116 = sbr.rel (%p113) target = $region12
    $region11: #{conv_bn_silu.1} parent=5 // pred_region
      %s117 = ssub.s32 %s9, 1
      // Predicated region
      $region13: #{conv_bn_silu.1} parent=11 // pred_check
        %p118 = pneg %p56
      $region14: #{conv_bn_silu.1} parent=11 // pred_check_branch
        %120 = sbr.rel (%p118) target = $region16
      $region15: #{conv_bn_silu.1} parent=11 // pred_region
        _
      $region16: #{conv_bn_silu.1} parent=11 // pred_fallthru
        _
      // Predicated region
      $region17: #{conv_bn_silu.1} parent=11 // pred_check
        %p121 = pneg %p77
      $region18: #{conv_bn_silu.1} parent=11 // pred_check_branch
        %123 = sbr.rel (%p121) target = $region20
      $region19: #{conv_bn_silu.1} parent=11 // pred_region
        _
      $region20: #{conv_bn_silu.1} parent=11 // pred_fallthru
        _
    $region12: #{conv_bn_silu.1} parent=5 // pred_fallthru
      _
    %p124 = scmp.lt.s32.totalorder %s9, 2
    // Predicated region
    $region21: #{conv_bn_silu.1} parent=5 // pred_check
      %p125 = pneg %p124
    $region22: #{conv_bn_silu.1} parent=5 // pred_check_branch
      %127 = sbr.rel (%p125) target = $region24
    $region23: #{conv_bn_silu.1} parent=5 // pred_region
      // Predicated region
      $region25: #{conv_bn_silu.1} parent=23 // pred_check
        %p128 = pneg %p29
      $region26: #{conv_bn_silu.1} parent=23 // pred_check_branch
        %130 = sbr.rel (%p128) target = $region28
      $region27: #{conv_bn_silu.1} parent=23 // pred_region
        %p131 = scmp.lt.s32.totalorder %s9, 1
        %s132 = scalar_select %p131, %s9, 1
        %s133 = smul.addr %s132, 6
        %s134 = smul.addr %s133, 4
        %s135 = scalar_lea.vmem %s0, %s134
      $region28: #{conv_bn_silu.1} parent=23 // pred_fallthru
        _
    $region24: #{conv_bn_silu.1} parent=5 // pred_fallthru
      _
    %p136 = scmp.le.s32.totalorder 1, %s9
    %p137 = scmp.lt.s32.totalorder %s9, 3
    %p138 = pnand %p136, %p137
    %p139 = pneg %p138
    // Predicated region
    $region29: #{conv_bn_silu.1} parent=5 // pred_check
      _
    $region30: #{conv_bn_silu.1} parent=5 // pred_check_branch
      %141 = sbr.rel (%p138) target = $region32
    $region31: #{conv_bn_silu.1} parent=5 // pred_region
      %s142 = ssub.s32 %s9, 1
      %p143 = scmp.lt.s32.totalorder %s14, 1
      %s144 = scalar_select %p143, %s14, 1
      %s145 = smul.addr %s144, 6
      %s146 = smul.addr %s145, 4
      %s147 = scalar_lea.vmem %s0, %s146
      %p148 = pneg %p35
      %p149 = pneg %p32
      %p150 = pneg %p56
      %p151 = pneg %p53
      %p152 = pneg %p77
      %p153 = pneg %p74
      %p154 = pneg %p103
      %p155 = pneg %p100
      %p156 = scmp.lt.s32.totalorder %s14, 1
      %s157 = scalar_select %p156, %s14, 1
      %s158 = smul.addr %s157, 3
      %s159 = smul.addr %s158, 8
      %s160 = scalar_lea.vmem %s3, %s159
      %p161 = scmp.lt.s32.totalorder %s14, 1
      %s162 = scalar_select %p161, %s14, 1
      %s163 = smul.addr %s162, 6
      %s164 = smul.addr %s163, 4
      %s165 = scalar_lea.vmem %s0, %s164
      %p166 = scmp.lt.s32.totalorder %s14, 1
      %s167 = scalar_select %p166, %s14, 1
      %s168 = smul.addr %s167, 3
      %s169 = smul.addr %s168, 8
      %s170 = scalar_lea.vmem %s3, %s169
      %v172 = vld [vmem:[%s165] sm:$0xff]
      %v173 = vld [vmem:[%s165 + $0x8] sm:$0xf]
      %v174 = vld [vmem:[%s165 + $0xc] sm:$0xff]
      %v175 = vld [vmem:[%s165 + $0x14] sm:$0xf]
      %v180 = vunpack.c.l.b16 %v172
      %v181 = vunpack.c.h.b16 %v172
      %v182 = vunpack.c.l.b16 %v173
      %v183 = vunpack.c.l.b16 %v174
      %v184 = vunpack.c.h.b16 %v174
      %v185 = vunpack.c.l.b16 %v175
      %v186 = vpack.c.b16 %v183, %v180
      %v187 = vpack.c.b16 %v184, %v181
      %v188 = vpack.c.b16 %v185, %v182
      %192 = vrot.lane.b32.xlu0 %v186, 127
      %v193 = vpop.permute.xlu0 %192
      %194 = vrot.lane.b32.xlu0 %v187, 127
      %v195 = vpop.permute.xlu0 %194
      %196 = vrot.lane.b32.xlu0 %v188, 127
      %v197 = vpop.permute.xlu0 %196
      %vm198 = vcmask 1039360
      %v199 = vsel %vm198, %v193, %v195
      %v200 = vsel %vm198, %v195, %v197
      %204 = vrot.lane.b32.xlu0 %v186, 126
      %v205 = vpop.permute.xlu0 %204
      %206 = vrot.lane.b32.xlu0 %v187, 126
      %v207 = vpop.permute.xlu0 %206
      %208 = vrot.lane.b32.xlu0 %v188, 126
      %v209 = vpop.permute.xlu0 %208
      %vm210 = vcmask 1031168
      %v211 = vsel %vm210, %v205, %v207
      %v212 = vsel %vm210, %v207, %v209
      %216 = vrot.lane.b32.xlu0 %v186, 110
      %v217 = vpop.permute.xlu0 %216
      %218 = vrot.lane.b32.xlu0 %v187, 110
      %v219 = vpop.permute.xlu0 %218
      %220 = vrot.lane.b32.xlu0 %v188, 110
      %v221 = vpop.permute.xlu0 %220
      %vm222 = vcmask 900096
      %v223 = vsel %vm222, %v217, %v219
      %v224 = vsel %vm222, %v219, %v221
      %228 = vrot.lane.b32.xlu0 %v186, 109
      %v229 = vpop.permute.xlu0 %228
      %230 = vrot.lane.b32.xlu0 %v187, 109
      %v231 = vpop.permute.xlu0 %230
      %232 = vrot.lane.b32.xlu0 %v188, 109
      %v233 = vpop.permute.xlu0 %232
      %vm234 = vcmask 891904
      %v235 = vsel %vm234, %v229, %v231
      %v236 = vsel %vm234, %v231, %v233
      %240 = vrot.lane.b32.xlu0 %v186, 108
      %v241 = vpop.permute.xlu0 %240
      %242 = vrot.lane.b32.xlu0 %v187, 108
      %v243 = vpop.permute.xlu0 %242
      %244 = vrot.lane.b32.xlu0 %v188, 108
      %v245 = vpop.permute.xlu0 %244
      %vm246 = vcmask 883712
      %v247 = vsel %vm246, %v241, %v243
      %v248 = vsel %vm246, %v243, %v245
      %252 = vrot.lane.b32.xlu0 %v186, 92
      %v253 = vpop.permute.xlu0 %252
      %254 = vrot.lane.b32.xlu0 %v187, 92
      %v255 = vpop.permute.xlu0 %254
      %256 = vrot.lane.b32.xlu0 %v188, 92
      %v257 = vpop.permute.xlu0 %256
      %vm258 = vcmask 752640
      %v259 = vsel %vm258, %v253, %v255
      %v260 = vsel %vm258, %v255, %v257
      %264 = vrot.lane.b32.xlu0 %v186, 91
      %v265 = vpop.permute.xlu0 %264
      %266 = vrot.lane.b32.xlu0 %v187, 91
      %v267 = vpop.permute.xlu0 %266
      %268 = vrot.lane.b32.xlu0 %v188, 91
      %v269 = vpop.permute.xlu0 %268
      %vm270 = vcmask 744448
      %v271 = vsel %vm270, %v265, %v267
      %v272 = vsel %vm270, %v267, %v269
      %276 = vrot.lane.b32.xlu0 %v186, 90
      %v277 = vpop.permute.xlu0 %276
      %278 = vrot.lane.b32.xlu0 %v187, 90
      %v279 = vpop.permute.xlu0 %278
      %280 = vrot.lane.b32.xlu0 %v188, 90
      %v281 = vpop.permute.xlu0 %280
      %vm282 = vcmask 736256
      %v283 = vsel %vm282, %v277, %v279
      %v284 = vsel %vm282, %v279, %v281
      %v288 = vld [vmem:[%s1] sm:$0xff]
      %v289 = vld [vmem:[%s2] sm:$0xff]
      %291 = vset.pattern.permute.xlu0 0
      %292 = vperm.xlu0 %291, %v289
      %v293 = vpop.permute.xlu0 %292
      %v296 = vunpack.c.l.b16 %v288
      %v297 = vunpack.c.h.b16 %v288
      %v298 = vpack.c.b16 %v296, %v296
      %v299 = vpack.c.b16 %v297, %v297
      %vm301 = vcmask 130048
      %v303 = vsel %vm301, %v299, 0
      %305 = vmatpush.bf16.msra.mxu0 %v271
      %306 = vmatpush.bf16.msra.mxu0 %v259
      %307 = vmatpush.bf16.msra.mxu0 %v247
      %308 = vmatpush.bf16.msra.mxu0 %v235
      %309 = vmatpush.bf16.msra.mxu0 %v223
      %310 = vmatpush.bf16.msra.mxu0 %v211
      %311 = vmatpush.bf16.msra.mxu0 %v199
      %312 = vmatpush.bf16.msra.mxu0 %v186
      %313 = vmatmul.bf16.gmra.mxu0 %v298
      %v314 = vpop.f32.mrf.mxu0
      %v315 = vadd.f32 %v293, %v314
      %v316 = vpop.f32.mrf.mxu0
      %317 = vdwg.mxu0
      %318 = vmatpush.bf16.msra.mxu0 0
      %319 = vmatpush.bf16.msra.mxu0 0
      %320 = vmatpush.bf16.msra.mxu0 0
      %321 = vmatpush.bf16.msra.mxu0 0
      %322 = vmatpush.bf16.msra.mxu0 0
      %323 = vmatpush.bf16.msra.mxu0 0
      %324 = vmatpush.bf16.msra.mxu0 0
      %325 = vmatpush.bf16.msra.mxu0 %v283
      %326 = vmatmul.bf16.gmra.mxu0 %v303
      %v327 = vpop.f32.mrf.mxu0
      %v328 = vadd.f32 %v315, %v327
      %v329 = vpop.f32.mrf.mxu0
      %330 = vdwg.mxu0
      %331 = vmatpush.bf16.msra.mxu0 %v272
      %332 = vmatpush.bf16.msra.mxu0 %v260
      %333 = vmatpush.bf16.msra.mxu0 %v248
      %334 = vmatpush.bf16.msra.mxu0 %v236
      %335 = vmatpush.bf16.msra.mxu0 %v224
      %336 = vmatpush.bf16.msra.mxu0 %v212
      %337 = vmatpush.bf16.msra.mxu0 %v200
      %338 = vmatpush.bf16.msra.mxu0 %v187
      %339 = vmatmul.bf16.gmra.mxu0 %v298
      %v340 = vpop.f32.mrf.mxu0
      %v341 = vadd.f32 %v293, %v340
      %v342 = vpop.f32.mrf.mxu0
      %343 = vdwg.mxu0
      %344 = vmatpush.bf16.msra.mxu0 0
      %345 = vmatpush.bf16.msra.mxu0 0
      %346 = vmatpush.bf16.msra.mxu0 0
      %347 = vmatpush.bf16.msra.mxu0 0
      %348 = vmatpush.bf16.msra.mxu0 0
      %349 = vmatpush.bf16.msra.mxu0 0
      %350 = vmatpush.bf16.msra.mxu0 0
      %351 = vmatpush.bf16.msra.mxu0 %v284
      %352 = vmatmul.bf16.gmra.mxu0 %v303
      %v353 = vpop.f32.mrf.mxu0
      %v354 = vadd.f32 %v341, %v353
      %v355 = vpop.f32.mrf.mxu0
      %356 = vdwg.mxu0
      %357 = vmatpush.bf16.msra.mxu0 %v269
      %358 = vmatpush.bf16.msra.mxu0 %v257
      %359 = vmatpush.bf16.msra.mxu0 %v245
      %360 = vmatpush.bf16.msra.mxu0 %v233
      %361 = vmatpush.bf16.msra.mxu0 %v221
      %362 = vmatpush.bf16.msra.mxu0 %v209
      %363 = vmatpush.bf16.msra.mxu0 %v197
      %364 = vmatpush.bf16.msra.mxu0 %v188
      %365 = vmatmul.bf16.gmra.mxu0 %v298
      %v366 = vpop.f32.mrf.mxu0
      %v367 = vadd.f32 %v293, %v366
      %v368 = vpop.f32.mrf.mxu0
      %369 = vdwg.mxu0
      %370 = vmatpush.bf16.msra.mxu0 0
      %371 = vmatpush.bf16.msra.mxu0 0
      %372 = vmatpush.bf16.msra.mxu0 0
      %373 = vmatpush.bf16.msra.mxu0 0
      %374 = vmatpush.bf16.msra.mxu0 0
      %375 = vmatpush.bf16.msra.mxu0 0
      %376 = vmatpush.bf16.msra.mxu0 0
      %377 = vmatpush.bf16.msra.mxu0 %v281
      %378 = vmatmul.bf16.gmra.mxu0 %v303
      %v379 = vpop.f32.mrf.mxu0
      %v380 = vadd.f32 %v367, %v379
      %v381 = vpop.f32.mrf.mxu0
      %382 = vdwg.mxu0
      %v383 = vxor.u32 %v328, 2147483648
      %v384 = vxor.u32 %v354, 2147483648
      %v385 = vxor.u32 %v380, 2147483648
      %v386 = vmul.f32 %v383, 1.442695
      %v387 = vpow.pop %v386
      %v388 = vmul.f32 %v384, 1.442695
      %v389 = vpow.pop %v388
      %v390 = vmul.f32 %v385, 1.442695
      %v391 = vpow.pop %v390
      %v392 = vadd.f32 %v387, 1.0
      %v393 = vadd.f32 %v389, 1.0
      %v394 = vadd.f32 %v391, 1.0
      %v395 = vrcp.pop %v392
      %v396 = vmul.f32 %v392, %v395
      %v397 = vsub.f32 1.0, %v396
      %v398 = vmul.f32 %v395, %v397
      %v399 = vadd.f32 %v395, %v398
      %vm400 = vweird.f32 %v392
      %vm401 = vweird.f32 %v395
      %vm402 = vmor %vm400, %vm401
      %v403 = vsel %vm402, %v395, %v399
      %v404 = vand.u32 2147483647, %v392
      %vm405 = vcmp.eq.f32.partialorder %v404, 8.507059e+37
      %v406 = vand.u32 %v392, 2147483648
      %v407 = vor.u32 1.1754944e-38, %v406
      %v408 = vsel %vm405, %v407, %v403
      %v409 = vmul.f32 1.0, %v408
      %v410 = vrcp.pop %v393
      %v411 = vmul.f32 %v393, %v410
      %v412 = vsub.f32 1.0, %v411
      %v413 = vmul.f32 %v410, %v412
      %v414 = vadd.f32 %v410, %v413
      %vm415 = vweird.f32 %v393
      %vm416 = vweird.f32 %v410
      %vm417 = vmor %vm415, %vm416
      %v418 = vsel %vm417, %v410, %v414
      %v419 = vand.u32 2147483647, %v393
      %vm420 = vcmp.eq.f32.partialorder %v419, 8.507059e+37
      %v421 = vand.u32 %v393, 2147483648
      %v422 = vor.u32 1.1754944e-38, %v421
      %v423 = vsel %vm420, %v422, %v418
      %v424 = vmul.f32 1.0, %v423
      %v425 = vrcp.pop %v394
      %v426 = vmul.f32 %v394, %v425
      %v427 = vsub.f32 1.0, %v426
      %v428 = vmul.f32 %v425, %v427
      %v429 = vadd.f32 %v425, %v428
      %vm430 = vweird.f32 %v394
      %vm431 = vweird.f32 %v425
      %vm432 = vmor %vm430, %vm431
      %v433 = vsel %vm432, %v425, %v429
      %v434 = vand.u32 2147483647, %v394
      %vm435 = vcmp.eq.f32.partialorder %v434, 8.507059e+37
      %v436 = vand.u32 %v394, 2147483648
      %v437 = vor.u32 1.1754944e-38, %v436
      %v438 = vsel %vm435, %v437, %v433
      %v439 = vmul.f32 1.0, %v438
      %v440 = vmul.f32 %v328, %v409
      %v441 = vmul.f32 %v354, %v424
      %v442 = vmul.f32 %v380, %v439
      %443 = vst [vmem:[%s170] sm:$0xff] %v440
      %444 = vst [vmem:[%s170 + $0x8] sm:$0xff] %v441
      %vm445 = vcmask 261120
      %446 = vst.msk [vmem:[%s170 + $0x10] sm:$0xff] %vm445, %v442
      %p447 = scmp.lt.s32.totalorder %s14, 1
      %s448 = scalar_select %p447, %s14, 1
      %s449 = smul.addr %s448, 3
      %s450 = smul.addr %s449, 8
      %s451 = scalar_lea.vmem %s3, %s450
      // Predicated region
      $region33: #{conv_bn_silu.1} parent=31 // pred_check
        %p452 = pneg %p100
      $region34: #{conv_bn_silu.1} parent=31 // pred_check_branch
        %454 = sbr.rel (%p452) target = $region36
      $region35: #{conv_bn_silu.1} parent=31 // pred_region
        _
      $region36: #{conv_bn_silu.1} parent=31 // pred_fallthru
        _
    $region32: #{conv_bn_silu.1} parent=5 // pred_fallthru
      _
    %p455 = scmp.le.s32.totalorder 2, %s9
    // Predicated region
    $region37: #{conv_bn_silu.1} parent=5 // pred_check
      %p456 = pneg %p455
    $region38: #{conv_bn_silu.1} parent=5 // pred_check_branch
      %458 = sbr.rel (%p456) target = $region40
    $region39: #{conv_bn_silu.1} parent=5 // pred_region
      %s459 = ssub.s32 %s9, 2
      // Predicated region
      $region41: #{conv_bn_silu.1} parent=39 // pred_check
        %p460 = pneg %p106
      $region42: #{conv_bn_silu.1} parent=39 // pred_check_branch
        %462 = sbr.rel (%p460) target = $region44
      $region43: #{conv_bn_silu.1} parent=39 // pred_region
        %p463 = scmp.lt.s32.totalorder %s15, 1
        %s464 = scalar_select %p463, %s15, 1
        %s465 = smul.addr %s464, 3
        %s466 = smul.addr %s465, 8
        %s467 = scalar_lea.vmem %s3, %s466
      $region44: #{conv_bn_silu.1} parent=39 // pred_fallthru
        _
    $region40: #{conv_bn_silu.1} parent=5 // pred_fallthru
      _
  $region6: #{conv_bn_silu.1} parent=0 // loop_footer
    %s13 = sadd.s32 1, %s9
  $region7: #{conv_bn_silu.1} parent=0 // loop_footer_branch
    %8 = sbr.rel target = $region3
  $region8: #{conv_bn_silu.1} parent=0 // loop_exit
    _

</llo_original>
